<compile_context>
chip_gen: v6e
topology: v6e:2x2x1
jax: 0.10.0
libtpu: 0.0.40
codegen_flags: <defaults>
</compile_context>

<pallas_src>
import functools
import math

import jax
import jax.numpy as jnp
from jax import lax
from jax.experimental import pallas as pl
from jax.experimental.pallas import tpu as pltpu


# ---------------------------------------------------------------------------
# helpers
# ---------------------------------------------------------------------------

def _pick_tile(dim, target, mult):
    """Largest multiple of `mult` that divides `dim` and is <= target (else `dim`)."""
    if dim <= target:
        return dim
    t = (target // mult) * mult
    while t >= mult:
        if dim % t == 0:
            return t
        t -= mult
    return dim


# Tile caps are chosen so (2 inputs x 2 pipeline buffers x tile) + f32 accumulator
# stays far below the 32 MiB scoped default (v7x has only 64 MiB physical VMEM).
_VMEM_LIMIT = 32 * 1024 * 1024


# ---------------------------------------------------------------------------
# Tiled linear kernel:  y = x @ w + b   (bias fused into the K-loop epilogue)
# ---------------------------------------------------------------------------

def _linear_kernel(x_ref, w_ref, b_ref, o_ref, acc_ref):
    @pl.when(pl.program_id(2) == 0)
    def _init():
        acc_ref[...] = jnp.zeros_like(acc_ref)

    acc_ref[...] += jnp.dot(x_ref[...], w_ref[...],
                            preferred_element_type=jnp.float32)

    @pl.when(pl.program_id(2) == pl.num_programs(2) - 1)
    def _finalize():
        o_ref[...] = (acc_ref[...] + b_ref[...]).astype(o_ref.dtype)


def pallas_linear(x, w, b, *, out_dtype=jnp.float32, tm=256, tn=256, tk=512):
    """x: [M, Din], w: [Din, Dout] (pre-transposed), b: [Dout] (kept f32)."""
    M, K = x.shape
    Kw, N = w.shape
    assert K == Kw
    tm = _pick_tile(M, tm, 8)
    tn = _pick_tile(N, tn, 128)
    tk = _pick_tile(K, tk, 128)
    grid = (M // tm, N // tn, K // tk)

    cost = pl.CostEstimate(
        flops=2 * M * N * K,
        transcendentals=0,
        bytes_accessed=(M * K * x.dtype.itemsize + K * N * w.dtype.itemsize
                        + N * 4 + M * N * jnp.dtype(out_dtype).itemsize),
    )
    return pl.pallas_call(
        _linear_kernel,
        out_shape=jax.ShapeDtypeStruct((M, N), out_dtype),
        grid=grid,
        in_specs=[
            pl.BlockSpec((tm, tk), lambda i, j, k: (i, k)),
            pl.BlockSpec((tk, tn), lambda i, j, k: (k, j)),
            pl.BlockSpec((1, tn), lambda i, j, k: (0, j)),
        ],
        out_specs=pl.BlockSpec((tm, tn), lambda i, j, k: (i, j)),
        scratch_shapes=[pltpu.VMEM((tm, tn), jnp.float32)],
        compiler_params=pltpu.CompilerParams(
            dimension_semantics=("parallel", "parallel", "arbitrary"),
            vmem_limit_bytes=_VMEM_LIMIT,
        ),
        cost_estimate=cost,
    )(x, w, b.astype(jnp.float32).reshape(1, N))


# ---------------------------------------------------------------------------
# Flash-style multi-head attention
#   inputs packed as qkv[S, B*3, H, dk]   (dim-1 index = b*3 + {0:q, 1:k, 2:v})
#   output lane-dense as       [B, S, H*dk]
# ---------------------------------------------------------------------------

def _flash_mha_kernel(q_ref, k_ref, v_ref, o_ref, m_ref, l_ref, acc_ref,
                      *, num_heads, dim_k):
    ki = pl.program_id(2)

    @pl.when(ki == 0)
    def _init():
        m_ref[...] = jnp.full_like(m_ref, -jnp.inf)
        l_ref[...] = jnp.zeros_like(l_ref)
        acc_ref[...] = jnp.zeros_like(acc_ref)

    # Static unroll over heads: plain 2-D MXU matmuls + f32 online softmax per head.
    for h in range(num_heads):
        q_h = q_ref[:, 0, h, :]                      # [tq, dk]  (bf16)
        k_h = k_ref[:, 0, h, :]                      # [tk, dk]
        v_h = v_ref[:, 0, h, :]                      # [tk, dk]

        # scores_ij = sum_d q_id k_jd  -- contraction expressed directly (no k.T copy).
        # NOTE: no 1/sqrt(dk) scale: the reference PyTorch forward never applies it.
        s = lax.dot_general(q_h, k_h, (((1,), (1,)), ((), ())),
                            preferred_element_type=jnp.float32)   # [tq, tk] f32

        m_prev = m_ref[h]                                         # [tq, 1]
        m_new = jnp.maximum(m_prev, jnp.max(s, axis=-1, keepdims=True))
        alpha = jnp.exp(m_prev - m_new)
        p = jnp.exp(s - m_new)                                    # f32 (EUP)
        l_ref[h] = alpha * l_ref[h] + jnp.sum(p, axis=-1, keepdims=True)

        pv = lax.dot_general(p.astype(v_h.dtype), v_h, (((1,), (0,)), ((), ())),
                             preferred_element_type=jnp.float32)  # [tq, dk]
        col = slice(h * dim_k, (h + 1) * dim_k)
        acc_ref[:, col] = alpha * acc_ref[:, col] + pv
        m_ref[h] = m_new

    # TODO(synk): optional mask support and training-mode attention dropout.

    @pl.when(ki == pl.num_programs(2) - 1)
    def _finalize():
        for h in range(num_heads):
            col = slice(h * dim_k, (h + 1) * dim_k)
            inv_l = pl.reciprocal(l_ref[h], approx=True)          # [tq, 1]
            o_ref[0, :, col] = (acc_ref[:, col] * inv_l).astype(o_ref.dtype)


def pallas_flash_mha(qkv, num_heads, dim_k, *, tq=128, tk_kv=128,
                     out_dtype=jnp.bfloat16):
    """qkv: [S, B*3, H, dk] packed projections -> attention output [B, S, H*dk]."""
    S, B3, H, dk = qkv.shape
    assert B3 % 3 == 0 and H == num_heads and dk == dim_k
    B = B3 // 3
    D = H * dk
    tq = _pick_tile(S, tq, 8)
    tk = _pick_tile(S, tk_kv, 8)
    grid = (B, S // tq, S // tk)

    cost = pl.CostEstimate(
        flops=4 * B * H * S * S * dk,
        transcendentals=B * H * S * S,
        bytes_accessed=(3 * B * S * D * qkv.dtype.itemsize
                        + B * S * D * jnp.dtype(out_dtype).itemsize),
    )
    kernel = functools.partial(_flash_mha_kernel, num_heads=H, dim_k=dk)
    return pl.pallas_call(
        kernel,
        out_shape=jax.ShapeDtypeStruct((B, S, D), out_dtype),
        grid=grid,
        in_specs=[
            # q / k / v blocks read straight out of the packed projection output:
            # no wrapper transpose on the input side.
            pl.BlockSpec((tq, 1, H, dk), lambda b, qi, ki: (qi, b * 3 + 0, 0, 0)),
            pl.BlockSpec((tk, 1, H, dk), lambda b, qi, ki: (ki, b * 3 + 1, 0, 0)),
            pl.BlockSpec((tk, 1, H, dk), lambda b, qi, ki: (ki, b * 3 + 2, 0, 0)),
        ],
        # lane-dense output: last block dim is the full model dim D.
        out_specs=pl.BlockSpec((1, tq, D), lambda b, qi, ki: (b, qi, 0)),
        scratch_shapes=[
            pltpu.VMEM((H, tq, 1), jnp.float32),   # running max   m
            pltpu.VMEM((H, tq, 1), jnp.float32),   # running sum   l
            pltpu.VMEM((tq, D), jnp.float32),      # unnormalized output accumulator
        ],
        compiler_params=pltpu.CompilerParams(
            dimension_semantics=("parallel", "parallel", "arbitrary"),
            vmem_limit_bytes=_VMEM_LIMIT,
        ),
        cost_estimate=cost,
    )(qkv, qkv, qkv)


# ---------------------------------------------------------------------------
# MultiHeadAttention forward (layout plumbing is free reshapes + one relayout)
# ---------------------------------------------------------------------------

def multi_head_attention(params, query, key, value, *, compute_dtype=jnp.bfloat16):
    """query/key/value: [S, B, dim_model] -> [S, B, dim_model] (f32)."""
    S, B, D = query.shape
    # TODO(synk): cross-attention with a key length different from the query length
    # needs a separate kv packing; the packed-qkv fast path assumes equal lengths.
    assert key.shape == value.shape == (S, B, D)
    H = params["num_heads"]
    dk = D // H

    wqkv = params["wqkv_t"].astype(compute_dtype)   # [3, D, D]  (bf16 MXU operands)
    bqkv = params["bqkv"]                           # [3, D]     (f32 bias)

    if query is key and key is value:
        # Self-attention: one fused [M, D] x [D, 3D] projection (one pipeline,
        # 3x the N dimension -> better MXU occupancy).
        w_fused = jnp.swapaxes(wqkv, 0, 1).reshape(D, 3 * D)
        b_fused = bqkv.reshape(3 * D)
        x_flat = query.reshape(S * B, D).astype(compute_dtype)
        qkv_flat = pallas_linear(x_flat, w_fused, b_fused,
                                 out_dtype=compute_dtype)          # [S*B, 3D]
        # Free reshape: row = s*B + b, column = p*D + h*dk + d  ->  [S, B*3, H, dk]
        qkv = qkv_flat.reshape(S, B * 3, H, dk)
    else:
        # General (cross-attention) path: three tiled projections.
        outs = []
        for p, x in enumerate((query, key, value)):
            y = pallas_linear(x.reshape(S * B, D).astype(compute_dtype),
                              wqkv[p], bqkv[p], out_dtype=compute_dtype)
            outs.append(y.reshape(S, B, 1, H, dk))
        qkv = jnp.concatenate(outs, axis=2).reshape(S, B * 3, H, dk)

    # Flash attention; output is lane-dense [B, S, D] (bf16).
    ctx = pallas_flash_mha(qkv, H, dk, out_dtype=compute_dtype)

    # Single remaining relayout: batch-major -> seq-major (module output convention).
    ctx = jnp.transpose(ctx, (1, 0, 2)).reshape(S * B, D)

    out = pallas_linear(ctx, params["wo_t"].astype(compute_dtype),
                        params["bo"], out_dtype=jnp.float32)        # [S*B, D]
    return out.reshape(S, B, D)


# ---------------------------------------------------------------------------
# Parameter init (deterministic, mimics nn.Linear shapes; weights pre-transposed)
# ---------------------------------------------------------------------------

def init_params(key, dim_model, num_heads):
    assert dim_model % num_heads == 0
    dk = dim_model // num_heads
    keys = jax.random.split(key, 8)
    bound = 1.0 / math.sqrt(dim_model)

    def lin(kw, kb, d_in, d_out):
        w_t = jax.random.uniform(kw, (d_in, d_out), jnp.float32, -bound, bound)
        b = jax.random.uniform(kb, (d_out,), jnp.float32, -bound, bound)
        return w_t, b

    wq_t, bq = lin(keys[0], keys[1], dim_model, num_heads * dk)
    wk_t, bk = lin(keys[2], keys[3], dim_model, num_heads * dk)
    wv_t, bv = lin(keys[4], keys[5], dim_model, num_heads * dk)
    wo_t, bo = lin(keys[6], keys[7], dim_model, dim_model)
    return dict(num_heads=num_heads,
                wqkv_t=jnp.stack([wq_t, wk_t, wv_t]),   # [3, D, D]
                bqkv=jnp.stack([bq, bk, bv]),           # [3, D]
                wo_t=wo_t, bo=bo)


# ---------------------------------------------------------------------------
# Pure-JAX reference (mirrors the PyTorch forward).  compute_dtype=jnp.bfloat16
# additionally mimics the kernel's bf16 MXU operand casts for a tight comparison;
# compute_dtype=jnp.float32 is the exact f32 reference.
# ---------------------------------------------------------------------------

def reference_forward(params, query, key, value, *, compute_dtype=jnp.float32):
    S, B, D = query.shape
    H = params["num_heads"]
    dk = D // H
    wqkv = params["wqkv_t"].astype(compute_dtype)
    bqkv = params["bqkv"]

    def proj(x, w, b):
        y = jnp.dot(x.reshape(S * B, D).astype(compute_dtype), w,
                    preferred_element_type=jnp.float32) + b
        return y.astype(compute_dtype).reshape(S, B, H, dk)

    q = proj(query, wqkv[0], bqkv[0])
    k = proj(key, wqkv[1], bqkv[1])
    v = proj(value, wqkv[2], bqkv[2])
    # no 1/sqrt(dk) scale: mirrors the PyTorch forward (self.scale is unused there)
    scores = jnp.einsum("ibhd,jbhd->ijbh",
                        q.astype(jnp.float32), k.astype(jnp.float32))
    attn = jax.nn.softmax(scores, axis=1)
    attn = attn.astype(compute_dtype).astype(jnp.float32)
    x = jnp.einsum("ijbh,jbhd->ibhd", attn, v.astype(jnp.float32))
    x = x.astype(compute_dtype).reshape(S * B, D)
    out = jnp.dot(x, params["wo_t"].astype(compute_dtype),
                  preferred_element_type=jnp.float32) + params["bo"]
    return out.reshape(S, B, D)


if __name__ == "__main__":
    seq_len, batch, num_heads, dim_model = 8, 2, 4, 32

    root = jax.random.PRNGKey(0)
    k_params, k_x, k_k, k_v = jax.random.split(root, 4)
    params = init_params(k_params, dim_model, num_heads)

    x = jax.random.normal(k_x, (seq_len, batch, dim_model), jnp.float32)

    # Self-attention path (fused QKV projection).
    out = jax.block_until_ready(multi_head_attention(params, x, x, x))
    assert out.shape == (seq_len, batch, dim_model)

    ref_matched = reference_forward(params, x, x, x, compute_dtype=jnp.bfloat16)
    ref_f32 = reference_forward(params, x, x, x, compute_dtype=jnp.float32)
    assert jnp.max(jnp.abs(out - ref_matched)) < 3e-2, "mismatch vs matched reference"
    assert jnp.max(jnp.abs(out - ref_f32)) < 2e-1, "mismatch vs f32 reference"

    # Cross-attention path (separate projections).
    key_in = jax.random.normal(k_k, (seq_len, batch, dim_model), jnp.float32)
    val_in = jax.random.normal(k_v, (seq_len, batch, dim_model), jnp.float32)
    out2 = jax.block_until_ready(multi_head_attention(params, x, key_in, val_in))
    ref2 = reference_forward(params, x, key_in, val_in, compute_dtype=jnp.bfloat16)
    assert out2.shape == (seq_len, batch, dim_model)
    assert jnp.max(jnp.abs(out2 - ref2)) < 3e-2, "mismatch vs reference (cross-attn)"

    print("KERNEL_OK")
</pallas_src>

<mosaic_0001>
module attributes {stable_mosaic.version = 11 : i64} {
  func.func @_linear_kernel(%arg0: i32, %arg1: i32, %arg2: i32, %arg3: memref<16x32xbf16, #tpu.memory_space<vmem>>, %arg4: memref<32x96xbf16, #tpu.memory_space<vmem>>, %arg5: memref<1x96xf32, #tpu.memory_space<vmem>>, %arg6: memref<16x96xbf16, #tpu.memory_space<vmem>>, %arg7: memref<16x96xf32, #tpu.memory_space<vmem>>) attributes {dimension_semantics = [#tpu.dimension_semantics<parallel>, #tpu.dimension_semantics<parallel>, #tpu.dimension_semantics<arbitrary>], iteration_bounds = array<i64: 1, 1, 1>, scalar_prefetch = 0 : i64, scratch_operands = 1 : i64, tpu.core_type = #tpu.core_type<tc>, window_params = [{transform_indices = @transform_0, window_bounds = array<i64: 16, 32>}, {transform_indices = @transform_1, window_bounds = array<i64: 32, 96>}, {transform_indices = @transform_2, window_bounds = array<i64: 1, 96>}, {transform_indices = @transform_3, window_bounds = array<i64: 16, 96>}]} {
    %c0_i32 = arith.constant 0 : i32
    %0 = arith.cmpi eq, %arg2, %c0_i32 : i32
    %1 = arith.extui %0 : i1 to i32
    %c0_i32_0 = arith.constant 0 : i32
    %2 = arith.cmpi ne, %1, %c0_i32_0 : i32
    scf.if %2 {
      %cst_10 = arith.constant 0.000000e+00 : f32
      %12 = vector.broadcast %cst_10 : f32 to vector<16x96xf32>
      %c0_11 = arith.constant 0 : index
      %c0_12 = arith.constant 0 : index
      %13 = vector.load %arg7[%c0_11, %c0_12] : memref<16x96xf32, #tpu.memory_space<vmem>>, vector<16x96xf32>
      tpu.vector_store %arg7[%c0_11, %c0_12], %12 {strides = array<i32>} : memref<16x96xf32, #tpu.memory_space<vmem>>, vector<16x96xf32>,
    } else {
    }
    %c0 = arith.constant 0 : index
    %c0_1 = arith.constant 0 : index
    %3 = vector.load %arg7[%c0, %c0_1] : memref<16x96xf32, #tpu.memory_space<vmem>>, vector<16x96xf32>
    %c0_2 = arith.constant 0 : index
    %c0_3 = arith.constant 0 : index
    %4 = vector.load %arg3[%c0_2, %c0_3] : memref<16x32xbf16, #tpu.memory_space<vmem>>, vector<16x32xbf16>
    %c0_4 = arith.constant 0 : index
    %c0_5 = arith.constant 0 : index
    %5 = vector.load %arg4[%c0_4, %c0_5] : memref<32x96xbf16, #tpu.memory_space<vmem>>, vector<32x96xbf16>
    %cst = arith.constant dense<0.000000e+00> : vector<16x96xf32>
    %6 = tpu.matmul %4, %5, %cst {dimension_numbers = #tpu.dot_dimension_numbers<[1], [0], [0], [1], [0, 0, 1, 1], [], []>} : vector<16x32xbf16>, vector<32x96xbf16>, vector<16x96xf32> -> vector<16x96xf32>
    %7 = arith.addf %3, %6 : vector<16x96xf32>
    %c0_6 = arith.constant 0 : index
    %c0_7 = arith.constant 0 : index
    %8 = vector.load %arg7[%c0_6, %c0_7] : memref<16x96xf32, #tpu.memory_space<vmem>>, vector<16x96xf32>
    tpu.vector_store %arg7[%c0_6, %c0_7], %7 {strides = array<i32>} : memref<16x96xf32, #tpu.memory_space<vmem>>, vector<16x96xf32>,
    %c0_i32_8 = arith.constant 0 : i32
    %9 = arith.cmpi eq, %arg2, %c0_i32_8 : i32
    %10 = arith.extui %9 : i1 to i32
    %c0_i32_9 = arith.constant 0 : i32
    %11 = arith.cmpi ne, %10, %c0_i32_9 : i32
    scf.if %11 {
      %c0_10 = arith.constant 0 : index
      %c0_11 = arith.constant 0 : index
      %12 = vector.load %arg7[%c0_10, %c0_11] : memref<16x96xf32, #tpu.memory_space<vmem>>, vector<16x96xf32>
      %c0_12 = arith.constant 0 : index
      %c0_13 = arith.constant 0 : index
      %13 = vector.load %arg5[%c0_12, %c0_13] : memref<1x96xf32, #tpu.memory_space<vmem>>, vector<1x96xf32>
      %14 = vector.broadcast %13 : vector<1x96xf32> to vector<16x96xf32>
      %15 = arith.addf %12, %14 : vector<16x96xf32>
      %16 = arith.truncf %15 : vector<16x96xf32> to vector<16x96xbf16>
      %c0_14 = arith.constant 0 : index
      %c0_15 = arith.constant 0 : index
      %17 = vector.load %arg6[%c0_14, %c0_15] : memref<16x96xbf16, #tpu.memory_space<vmem>>, vector<16x96xbf16>
      tpu.vector_store %arg6[%c0_14, %c0_15], %16 {strides = array<i32>} : memref<16x96xbf16, #tpu.memory_space<vmem>>, vector<16x96xbf16>,
    } else {
    }
    return
  }
  func.func @transform_0(%arg0: i32, %arg1: i32, %arg2: i32) -> (i32, i32) {
    %c0_i32 = arith.constant 0 : i32
    return %arg0, %arg2 : i32, i32
  }
  func.func @transform_1(%arg0: i32, %arg1: i32, %arg2: i32) -> (i32, i32) {
    %c0_i32 = arith.constant 0 : i32
    return %arg2, %arg1 : i32, i32
  }
  func.func @transform_2(%arg0: i32, %arg1: i32, %arg2: i32) -> (i32, i32) {
    %c0_i32 = arith.constant 0 : i32
    %c0_i32_0 = arith.constant 0 : i32
    return %c0_i32, %arg1 : i32, i32
  }
  func.func @transform_3(%arg0: i32, %arg1: i32, %arg2: i32) -> (i32, i32) {
    %c0_i32 = arith.constant 0 : i32
    return %arg0, %arg1 : i32, i32
  }
}

</mosaic_0001>

<llo_original>
// kernel: tpu_custom_call.1
$region0: #{tpu_custom_call.1}
  #allocation0 [shape = 'u32[]', space=smem, size = 0x4, offset = 0x4, fixed_abs, tag = 'smem constant byte address 0x4 - core index']
  #allocation1 [shape = 'u32[144,128]{1,0:T(1,128)}', space=vmem, size = 0x12000, scoped, tag = 'internal scratch']
  #allocation2 [shape = 'f32[16,96]{1,0:T(8,128)}', space=vmem, size = 0x2000, scoped, tag = 'scratch operand']
  %s0 = inlined_call_operand.hbm [shape: bf16[16,32], index: 0, kind: input, shape index: {}]
  %s1 = inlined_call_operand.hbm [shape: bf16[32,96], index: 1, kind: input, shape index: {}]
  %s2 = inlined_call_operand.vmem [shape: f32[1,96], index: 2, kind: input, shape index: {}]
  %s3 = inlined_call_operand.hbm [shape: bf16[16,96], index: 3, kind: output, shape index: {}]
  %s4 = sld [smem:[#allocation0]]
  $region38: #{tpu_custom_call.1} parent=0
    _
  %s6 = ssub.s32 1, %s4
  %s7 = scalar_select 0, %s6, %s4
  $region1: #{tpu_custom_call.1} parent=0
    #allocation3 [shape = 'u8[4096]{0}', space=vmem, size = 0x1000, scoped, tag = 'input window, operand 0, single buffered']
    #allocation4 [shape = 's32[1]{0}', space=sflag, size = 0x4, scoped, tag = 'scoped memory for tpu_custom_call.1']
    #allocation5 [shape = 's32[1]{0}', space=sflag, size = 0x4, scoped, tag = 'scoped memory for tpu_custom_call.1']
    #allocation6 [shape = 'u8[8192]{0}', space=vmem, size = 0x2000, scoped, tag = 'input window, operand 1, single buffered']
    #allocation7 [shape = 's32[1]{0}', space=sflag, size = 0x4, scoped, tag = 'scoped memory for tpu_custom_call.1']
    #allocation8 [shape = 'u8[4096]{0}', space=vmem, size = 0x1000, scoped, tag = 'output window, operand 0, single buffered']
    %8 = vsyncpa [#allocation4], 0
    %9 = vsyncpa [#allocation7], 0
    %10 = vsyncpa [#allocation5], 0
    // Predicated region
    $region2: #{tpu_custom_call.1} parent=1 // pred_check
      _
    $region3: #{tpu_custom_call.1} parent=1 // pred_check_branch
      %12 = sbr.rel (0) target = $region5
    $region4: #{tpu_custom_call.1} parent=1 // pred_region
      %s14 = ssub.s32 128, 128
      %15 = vsyncadd [#allocation4], %s14
      %s16 = sshll.u32 [#allocation3], 4
      %s17 = int_to_ptr.vmem [resolvable:$true] %s16
      %22 = dma.hbm_to_vmem [thread:$0]  %s0, 128, %s17, [#allocation4], 64, 64, 4
    $region5: #{tpu_custom_call.1} parent=1 // pred_fallthru
      _
    // Predicated region
    $region6: #{tpu_custom_call.1} parent=1 // pred_check
      _
    $region7: #{tpu_custom_call.1} parent=1 // pred_check_branch
      %24 = sbr.rel (0) target = $region9
    $region8: #{tpu_custom_call.1} parent=1 // pred_region
      %s26 = ssub.s32 256, 256
      %27 = vsyncadd [#allocation7], %s26
      %s28 = sshll.u32 [#allocation6], 4
      %s29 = int_to_ptr.vmem [resolvable:$true] %s28
      %34 = dma.hbm_to_vmem [thread:$0]  %s1, 256, %s29, [#allocation7], 64, 64, 4
    $region9: #{tpu_custom_call.1} parent=1 // pred_fallthru
      _
    // Predicated region
    $region10: #{tpu_custom_call.1} parent=1 // pred_check
      _
    $region11: #{tpu_custom_call.1} parent=1 // pred_check_branch
      %36 = sbr.rel (0) target = $region13
    $region12: #{tpu_custom_call.1} parent=1 // pred_region
      _
    $region13: #{tpu_custom_call.1} parent=1 // pred_fallthru
      _
    // Predicated region
    $region14: #{tpu_custom_call.1} parent=1 // pred_check
      _
    $region15: #{tpu_custom_call.1} parent=1 // pred_check_branch
      %38 = sbr.rel (0) target = $region17
    $region16: #{tpu_custom_call.1} parent=1 // pred_region
      %39 = dma.done [#allocation4], 128
    $region17: #{tpu_custom_call.1} parent=1 // pred_fallthru
      _
    // Predicated region
    $region18: #{tpu_custom_call.1} parent=1 // pred_check
      _
    $region19: #{tpu_custom_call.1} parent=1 // pred_check_branch
      %41 = sbr.rel (0) target = $region21
    $region20: #{tpu_custom_call.1} parent=1 // pred_region
      %42 = dma.done [#allocation7], 256
    $region21: #{tpu_custom_call.1} parent=1 // pred_fallthru
      _
    %p44 = scmp.eq.s32.totalorder 0, 0
    // Predicated region
    $region22: #{tpu_custom_call.1} parent=1 // pred_check
      %p45 = pneg %p44
    $region23: #{tpu_custom_call.1} parent=1 // pred_check_branch
      %47 = sbr.rel (%p45) target = $region25
    $region24: #{tpu_custom_call.1} parent=1 // pred_region
      %vm48 = vcmask 785408
      %49 = vst.msk [vmem:[#allocation2] sm:$0xff] %vm48, 0.0
      %50 = vst.msk [vmem:[#allocation2 + $0x8] sm:$0xff] %vm48, 0.0
    $region25: #{tpu_custom_call.1} parent=1 // pred_fallthru
      _
    %v51 = vld [vmem:[#allocation2] sm:$0xff]
    %v52 = vld [vmem:[#allocation2 + $0x8] sm:$0xff]
    %v53 = vld [vmem:[#allocation3] sm:$0xf]
    %v54 = vld [vmem:[#allocation3 + $0x4] sm:$0xf]
    %v55 = vld [vmem:[#allocation6] sm:$0xf]
    %v56 = vld [vmem:[#allocation6 + $0x4] sm:$0xf]
    %v57 = vld [vmem:[#allocation6 + $0x8] sm:$0xf]
    %v58 = vld [vmem:[#allocation6 + $0xc] sm:$0xf]
    %v61 = vunpack.c.l.b16 %v53
    %v62 = vunpack.c.l.b16 %v54
    %v63 = vpack.c.b16 %v62, %v61
    %v68 = vunpack.c.l.b16 %v55
    %v69 = vunpack.c.l.b16 %v56
    %v70 = vunpack.c.l.b16 %v57
    %v71 = vunpack.c.l.b16 %v58
    %v72 = vpack.c.b16 %v69, %v68
    %v73 = vpack.c.b16 %v71, %v70
    %vm76 = vcmask 261120
    %v78 = vsel %vm76, %v63, 0
    %80 = vmatprep.subr.bf16.mxu0 0
    %81 = vmatpush1.bf16.msra.mxu0 0
    %82 = vmatprep.subr.bf16.mxu0 0
    %83 = vmatpush1.bf16.msra.mxu0 0
    %84 = vmatprep.subr.bf16.mxu0 0
    %85 = vmatpush1.bf16.msra.mxu0 0
    %86 = vmatprep.subr.bf16.mxu0 0
    %87 = vmatpush1.bf16.msra.mxu0 0
    %88 = vmatprep.subr.bf16.mxu0 0
    %89 = vmatpush1.bf16.msra.mxu0 0
    %90 = vmatprep.subr.bf16.mxu0 0
    %91 = vmatpush1.bf16.msra.mxu0 0
    %92 = vmatprep.subr.bf16.mxu0 0
    %93 = vmatpush1.bf16.msra.mxu0 %v73
    %94 = vmatprep.subr.bf16.mxu0 0
    %95 = vmatpush1.bf16.msra.mxu0 %v72
    %96 = vmatprep.subr.bf16.mxu0 0
    %97 = vmatpush2.bf16.msra.mxu0 0
    %98 = vmatprep.subr.bf16.mxu0 0
    %99 = vmatpush2.bf16.msra.mxu0 0
    %100 = vmatprep.subr.bf16.mxu0 0
    %101 = vmatpush2.bf16.msra.mxu0 0
    %102 = vmatprep.subr.bf16.mxu0 0
    %103 = vmatpush2.bf16.msra.mxu0 0
    %104 = vmatprep.subr.bf16.mxu0 0
    %105 = vmatpush2.bf16.msra.mxu0 0
    %106 = vmatprep.subr.bf16.mxu0 0
    %107 = vmatpush2.bf16.msra.mxu0 0
    %108 = vmatprep.subr.bf16.mxu0 0
    %109 = vmatpush2.bf16.msra.mxu0 0
    %110 = vmatprep.subr.bf16.mxu0 0
    %111 = vmatpush2.bf16.msra.mxu0 0
    %112 = vmatprep.mubr.bf16.mxu0 0
    %113 = vmatmul.mubr.bf16.gmra.mxu0 %v78
    %v114 = vpop.f32.mrf.mxu0
    %v115 = vadd.f32 0.0, %v114
    %v116 = vpop.f32.mrf.mxu0
    %v117 = vpop.f32.mrf.mxu0
    %v118 = vadd.f32 0.0, %v117
    %v119 = vpop.f32.mrf.mxu0
    %120 = vdwg.mxu0
    %v121 = vadd.f32 %v51, %v115
    %v122 = vadd.f32 %v52, %v118
    %vm123 = vcmask 785408
    %124 = vst.msk [vmem:[#allocation2] sm:$0xff] %vm123, %v121
    %125 = vst.msk [vmem:[#allocation2 + $0x8] sm:$0xff] %vm123, %v122
    // Predicated region
    $region26: #{tpu_custom_call.1} parent=1 // pred_check
      %p126 = pneg %p44
    $region27: #{tpu_custom_call.1} parent=1 // pred_check_branch
      %128 = sbr.rel (%p126) target = $region29
    $region28: #{tpu_custom_call.1} parent=1 // pred_region
      %v129 = vld [vmem:[#allocation2] sm:$0xff]
      %v130 = vld [vmem:[#allocation2 + $0x8] sm:$0xff]
      %v131 = vld [vmem:[%s2] sm:$0x1]
      %v133 = vlaneseq
      %v134 = vshrl.u32 %v133, 7
      %v135 = vsub.s32 0, %v134
      %v136 = vrot.slane %v131, %v135
      %v138 = vadd.f32 %v129, %v136
      %v139 = vadd.f32 %v130, %v136
      %v140 = vpack.c.bf16 %v139, %v138
      %v142 = vunpack.c.l.b16 %v140
      %v143 = vunpack.c.h.b16 %v140
      %v144 = vpack.c.b16 %v142, %v142
      %v145 = vpack.c.b16 %v143, %v143
      %vm148 = vcmask 781312
      %149 = vst.msk [vmem:[#allocation8] sm:$0xf] %vm148, %v144
      %150 = vst.msk [vmem:[#allocation8 + $0x4] sm:$0xf] %vm148, %v145
    $region29: #{tpu_custom_call.1} parent=1 // pred_fallthru
      _
    // Predicated region
    $region30: #{tpu_custom_call.1} parent=1 // pred_check
      _
    $region31: #{tpu_custom_call.1} parent=1 // pred_check_branch
      %152 = sbr.rel (0) target = $region33
    $region32: #{tpu_custom_call.1} parent=1 // pred_region
      %s154 = ssub.s32 128, 128
      %155 = vsyncadd [#allocation5], %s154
      %s156 = sshll.u32 [#allocation8], 4
      %s157 = int_to_ptr.vmem [resolvable:$true] %s156
      %162 = dma.vmem_to_hbm [thread:$0]  %s157, 128, %s3, [#allocation5], 64, 64, 4
    $region33: #{tpu_custom_call.1} parent=1 // pred_fallthru
      _
    // Predicated region
    $region34: #{tpu_custom_call.1} parent=1 // pred_check
      _
    $region35: #{tpu_custom_call.1} parent=1 // pred_check_branch
      %164 = sbr.rel (0) target = $region37
    $region36: #{tpu_custom_call.1} parent=1 // pred_region
      %165 = dma.done [#allocation5], 128
    $region37: #{tpu_custom_call.1} parent=1 // pred_fallthru
      _
    %166 = vsyncpa [#allocation4], 1
    %167 = vsyncpa [#allocation7], 1
    %168 = vsyncpa [#allocation5], 1

</llo_original>
